<compile_context>
chip_gen: v7x
topology: tpu7x:2x2x1
jax: 0.10.0
libtpu: 0.0.40
codegen_flags: <defaults>
</compile_context>

<pallas_src>
import functools

import jax
import jax.numpy as jnp
from jax.experimental import pallas as pl
from jax.experimental.pallas import tpu as pltpu

# ---------------- configuration (matches LFQWrapper(dim=8, ...)) ----------------
CODE_DIM = 8                        # LFQ code dimension ("dim" in the module)
N_REGIONS = 4                       # number of face regions (wrapper-internal)
D_OUT = N_REGIONS * CODE_DIM        # 32  (projection width)
NUM_CODES = 2 ** CODE_DIM           # 256 implicit codebook entries
LOGITS_W = N_REGIONS * NUM_CODES    # 1024 (all region logits, lane-aligned)
FUSED_W = LOGITS_W + D_OUT          # 1056 fused matmul output width
ENTROPY_LOSS_WEIGHT = 0.1
DIVERSITY_GAMMA = 1.0
COMMIT_LOSS_WEIGHT = 0.25
INV_TEMPERATURE = 100.0
TILE_ROWS = 512                     # row tile over batch*time; fits all generations' VMEM


# ---------------------------- fused Pallas kernel --------------------------------
def _lfq_fused_kernel(x_ref, w_ref, b_ref, quant_ref, idx_ref, stats_ref, *, total_rows):
    i = pl.program_id(0)
    x = x_ref[...]                                               # (tile, c_in) f32
    tile = x.shape[0]

    # mask rows past the logical end (partial last tile) so partial sums stay exact
    row_ids = i * tile + jax.lax.broadcasted_iota(jnp.int32, (tile, 1), 0)
    valid = (row_ids < total_rows).astype(jnp.float32)           # (tile, 1)
    x = x * valid                                                # zero padded/garbage rows

    # one fused MXU pass: columns = [region logits (4*256, pre-scaled & biased) | z (32)]
    y = jnp.dot(x, w_ref[...], preferred_element_type=jnp.float32) + b_ref[...]
    z = y[:, LOGITS_W:LOGITS_W + D_OUT]                          # (tile, 32), lane offset 1024

    # --- sign quantization ---
    quant = jnp.where(z > 0, 1.0, -1.0).astype(jnp.float32)
    quant_ref[...] = quant

    # --- per-region integer code indices: bits @ powers, powers[r*8+c, r] = 2^c ---
    f_id = jax.lax.broadcasted_iota(jnp.int32, (D_OUT, N_REGIONS), 0)
    r_id = jax.lax.broadcasted_iota(jnp.int32, (D_OUT, N_REGIONS), 1)
    c_id = f_id - r_id * CODE_DIM
    in_reg = jnp.logical_and(c_id >= 0, c_id < CODE_DIM)
    shifts = jnp.where(in_reg, c_id, 0)
    powers = jnp.where(in_reg, jax.lax.shift_left(jnp.ones_like(c_id), shifts), 0)
    bits = (z > 0).astype(jnp.float32)
    idx_f = jnp.dot(bits, powers.astype(jnp.float32),
                    preferred_element_type=jnp.float32)          # (tile, 4), values <= 255
    idx_ref[...] = idx_f.astype(jnp.int32)

    # --- commitment partial sum ---
    sq_row = jnp.sum((z - quant) ** 2, axis=-1, keepdims=True)   # (tile, 1)
    sq_sum = jnp.sum(sq_row * valid)

    # --- entropy partial sums over the regions (logits already scaled by 2*inv_temperature) ---
    ent_sum = jnp.float32(0.0)
    p_sum = jnp.zeros((1, NUM_CODES), jnp.float32)
    for r in range(N_REGIONS):                                   # static 4x unroll
        logits = y[:, r * NUM_CODES:(r + 1) * NUM_CODES]         # (tile, 256), 128-aligned
        m = jnp.max(logits, axis=-1, keepdims=True)
        e = jnp.exp(logits - m)
        s = jnp.sum(e, axis=-1, keepdims=True)
        p = e * pl.reciprocal(s, approx=True)                    # (tile, 256)
        # H = logsumexp - sum(p * logits)   (no (tile, 256) log(p) temporary)
        h_row = (m + jnp.log(s)) - jnp.sum(p * logits, axis=-1, keepdims=True)
        ent_sum = ent_sum + jnp.sum(h_row * valid)
        p_sum = p_sum + jnp.sum(p * valid, axis=0, keepdims=True)

    # pack partial sums into one lane-dense (8, 256) stats block:
    #   row 0: sum of p over (rows, regions); row 1: sum per-row entropy; row 2: sum sq error
    row_sel = jax.lax.broadcasted_iota(jnp.int32, (8, NUM_CODES), 0)
    stats = jnp.where(row_sel == 0, p_sum, 0.0)
    stats = jnp.where(row_sel == 1, ent_sum, stats)
    stats = jnp.where(row_sel == 2, sq_sum, stats)
    stats_ref[...] = stats


# ---------------------------- wrapper ---------------------------------------------
def _implicit_codebook_t():
    # all {-1,+1}^CODE_DIM combos; bit i of code j maps to dim i
    codes = jnp.arange(NUM_CODES, dtype=jnp.int32)[:, None]
    bit_pos = jnp.arange(CODE_DIM, dtype=jnp.int32)[None, :]
    bits = (codes >> bit_pos) & 1
    codebook = bits.astype(jnp.float32) * 2.0 - 1.0              # (256, 8)
    return codebook.T                                             # (8, 256)


@jax.jit
def lfq_wrapper_forward(x, w, b):
    """x: (B, T, c_in), w: (c_in, 32), b: (32,) ->
       (quant (B, code_dim, T*N_REGIONS), emb_loss scalar, info tuple)."""
    B, T, C_in = x.shape
    bt = B * T
    h = T * N_REGIONS

    # ---- fold projection + codebook matmul + temperature into one weight matrix ----
    cbt = _implicit_codebook_t()                                  # (8, 256)
    scale = 2.0 * INV_TEMPERATURE
    w_r = w.reshape(C_in, N_REGIONS, CODE_DIM)
    w_cb = (jnp.einsum("cnd,de->cne", w_r, cbt) * scale).reshape(C_in, LOGITS_W)
    w_big = jnp.concatenate([w_cb, w], axis=1).astype(jnp.float32)          # (C_in, 1056)
    b_r = b.reshape(N_REGIONS, CODE_DIM)
    b_cb = ((b_r @ cbt) * scale).reshape(LOGITS_W)
    b_big = jnp.concatenate([b_cb, b])[None, :].astype(jnp.float32)         # (1, 1056)

    x2 = x.reshape(bt, C_in).astype(jnp.float32)

    tile = bt if bt <= TILE_ROWS else TILE_ROWS
    num_tiles = pl.cdiv(bt, tile)

    kernel = functools.partial(_lfq_fused_kernel, total_rows=bt)
    quant_flat, idx_flat, stats = pl.pallas_call(
        kernel,
        out_shape=(
            jax.ShapeDtypeStruct((bt, D_OUT), jnp.float32),                 # sign(z)
            jax.ShapeDtypeStruct((bt, N_REGIONS), jnp.int32),               # code indices
            jax.ShapeDtypeStruct((num_tiles, 8, NUM_CODES), jnp.float32),   # per-tile partials
        ),
        grid=(num_tiles,),
        in_specs=[
            pl.BlockSpec((tile, C_in), lambda i: (i, 0)),
            pl.BlockSpec((C_in, FUSED_W), lambda i: (0, 0)),
            pl.BlockSpec((1, FUSED_W), lambda i: (0, 0)),
        ],
        out_specs=(
            pl.BlockSpec((tile, D_OUT), lambda i: (i, 0)),
            pl.BlockSpec((tile, N_REGIONS), lambda i: (i, 0)),
            pl.BlockSpec((None, 8, NUM_CODES), lambda i: (i, 0, 0)),
        ),
        compiler_params=pltpu.CompilerParams(
            dimension_semantics=("parallel",)),
    )(x2, w_big, b_big)

    # ---- global reduction of per-tile partial sums (tiny, plain XLA) ----
    n_codes_total = bt * N_REGIONS
    p_total = jnp.sum(stats[:, 0, :], axis=0)                    # (256,)
    ent_total = jnp.sum(stats[:, 1, 0])
    sq_total = jnp.sum(stats[:, 2, 0])

    per_sample_entropy = ent_total / n_codes_total
    avg_p = p_total / n_codes_total
    codebook_entropy = -jnp.sum(avg_p * jnp.log(avg_p + 1e-12))
    commit = sq_total / (bt * D_OUT)
    entropy_aux = per_sample_entropy - DIVERSITY_GAMMA * codebook_entropy
    emb_loss = ENTROPY_LOSS_WEIGHT * entropy_aux + COMMIT_LOSS_WEIGHT * commit

    # ---- final layouts (quant kept f32; values are exactly +/-1) ----
    quant = (quant_flat.reshape(B, T, N_REGIONS, CODE_DIM)
             .transpose(0, 3, 1, 2).reshape(B, CODE_DIM, h))     # (B, code_dim, h)
    indices = idx_flat.reshape(B, h)
    info = (per_sample_entropy, codebook_entropy, commit, indices)
    return quant, emb_loss, info


if __name__ == "__main__":
    # small shapes consistent with the module: batch=2, time=8, c_in = V*3 with V=4 -> 12
    B, T, V = 2, 8, 4
    C_IN = V * 3
    key = jax.random.PRNGKey(0)
    kx, kw = jax.random.split(key)
    x = jax.random.normal(kx, (B, T, C_IN), dtype=jnp.float32)
    w = jax.random.normal(kw, (C_IN, D_OUT), dtype=jnp.float32) * 0.02
    b = jnp.zeros((D_OUT,), dtype=jnp.float32)

    quant, emb_loss, info = lfq_wrapper_forward(x, w, b)
    jax.block_until_ready((quant, emb_loss, info))

    assert quant.shape == (B, CODE_DIM, T * N_REGIONS)
    assert emb_loss.shape == ()
    assert info[3].shape == (B, T * N_REGIONS)
    assert bool(jnp.isfinite(emb_loss))
    print("KERNEL_OK")
</pallas_src>

<mosaic_0001>
module attributes {stable_mosaic.version = 11 : i64} {
  func.func @_lfq_fused_kernel(%arg0: i32, %arg1: memref<16x12xf32, #tpu.memory_space<vmem>>, %arg2: memref<12x1056xf32, #tpu.memory_space<vmem>>, %arg3: memref<1x1056xf32, #tpu.memory_space<vmem>>, %arg4: memref<16x32xf32, #tpu.memory_space<vmem>>, %arg5: memref<16x4xi32, #tpu.memory_space<vmem>>, %arg6: memref<1x8x256xf32, #tpu.memory_space<vmem>>) attributes {dimension_semantics = [#tpu.dimension_semantics<parallel>], iteration_bounds = array<i64: 1>, scalar_prefetch = 0 : i64, scratch_operands = 0 : i64, tpu.core_type = #tpu.core_type<tc>, window_params = [{transform_indices = @transform_0, window_bounds = array<i64: 16, 12>}, {pipeline_mode = #tpu.pipeline_mode<synchronous>, transform_indices = @transform_1, window_bounds = array<i64: 12, 1056>}, {pipeline_mode = #tpu.pipeline_mode<synchronous>, transform_indices = @transform_2, window_bounds = array<i64: 1, 1056>}, {transform_indices = @transform_3, window_bounds = array<i64: 16, 32>}, {transform_indices = @transform_4, window_bounds = array<i64: 16, 4>}, {transform_indices = @transform_5, window_bounds = array<i64: 1, 8, 256>}]} {
    %c0 = arith.constant 0 : index
    %c0_0 = arith.constant 0 : index
    %0 = vector.load %arg1[%c0, %c0_0] : memref<16x12xf32, #tpu.memory_space<vmem>>, vector<16x12xf32>
    %c16_i32 = arith.constant 16 : i32
    %1 = arith.muli %arg0, %c16_i32 : i32
    %2 = tpu.iota {dimensions = array<i32: 0>} : vector<16x1xi32>
    %3 = vector.broadcast %1 : i32 to vector<16x1xi32>
    %4 = arith.addi %3, %2 : vector<16x1xi32>
    %c16_i32_1 = arith.constant 16 : i32
    %5 = vector.broadcast %c16_i32_1 : i32 to vector<16x1xi32>
    %6 = arith.cmpi slt, %4, %5 : vector<16x1xi32>
    %7 = arith.extui %6 : vector<16x1xi1> to vector<16x1xi32>
    %8 = arith.sitofp %7 : vector<16x1xi32> to vector<16x1xf32>
    %9 = vector.broadcast %8 : vector<16x1xf32> to vector<16x12xf32>
    %10 = arith.mulf %0, %9 : vector<16x12xf32>
    %c0_2 = arith.constant 0 : index
    %c0_3 = arith.constant 0 : index
    %11 = vector.load %arg2[%c0_2, %c0_3] : memref<12x1056xf32, #tpu.memory_space<vmem>>, vector<12x1056xf32>
    %cst = arith.constant dense<0.000000e+00> : vector<16x1056xf32>
    %12 = tpu.matmul %10, %11, %cst {dimension_numbers = #tpu.dot_dimension_numbers<[1], [0], [0], [1], [0, 0, 1, 1], [], []>} : vector<16x12xf32>, vector<12x1056xf32>, vector<16x1056xf32> -> vector<16x1056xf32>
    %c0_4 = arith.constant 0 : index
    %c0_5 = arith.constant 0 : index
    %13 = vector.load %arg3[%c0_4, %c0_5] : memref<1x1056xf32, #tpu.memory_space<vmem>>, vector<1x1056xf32>
    %14 = vector.broadcast %13 : vector<1x1056xf32> to vector<16x1056xf32>
    %15 = arith.addf %12, %14 : vector<16x1056xf32>
    %16 = vector.extract_strided_slice %15 {offsets = [0, 1024], sizes = [16, 32], strides = [1, 1]} : vector<16x1056xf32> to vector<16x32xf32>
    %cst_6 = arith.constant 0.000000e+00 : f32
    %17 = vector.broadcast %cst_6 : f32 to vector<16x32xf32>
    %18 = arith.cmpf ogt, %16, %17 : vector<16x32xf32>
    %cst_7 = arith.constant 1.000000e+00 : f32
    %cst_8 = arith.constant -1.000000e+00 : f32
    %19 = vector.broadcast %cst_7 : f32 to vector<16x32xf32>
    %20 = vector.broadcast %cst_8 : f32 to vector<16x32xf32>
    %21 = arith.select %18, %19, %20 : vector<16x32xi1>, vector<16x32xf32>
    %c0_9 = arith.constant 0 : index
    %c0_10 = arith.constant 0 : index
    %22 = vector.load %arg4[%c0_9, %c0_10] : memref<16x32xf32, #tpu.memory_space<vmem>>, vector<16x32xf32>
    tpu.vector_store %arg4[%c0_9, %c0_10], %21 {strides = array<i32>} : memref<16x32xf32, #tpu.memory_space<vmem>>, vector<16x32xf32>,
    %23 = tpu.iota {dimensions = array<i32: 0>} : vector<32x4xi32>
    %24 = tpu.iota {dimensions = array<i32: 1>} : vector<32x4xi32>
    %c8_i32 = arith.constant 8 : i32
    %25 = vector.broadcast %c8_i32 : i32 to vector<32x4xi32>
    %26 = arith.muli %24, %25 : vector<32x4xi32>
    %27 = arith.subi %23, %26 : vector<32x4xi32>
    %c0_i32 = arith.constant 0 : i32
    %28 = vector.broadcast %c0_i32 : i32 to vector<32x4xi32>
    %29 = arith.cmpi sge, %27, %28 : vector<32x4xi32>
    %c8_i32_11 = arith.constant 8 : i32
    %30 = vector.broadcast %c8_i32_11 : i32 to vector<32x4xi32>
    %31 = arith.cmpi slt, %27, %30 : vector<32x4xi32>
    %32 = arith.andi %29, %31 : vector<32x4xi1>
    %c0_i32_12 = arith.constant 0 : i32
    %33 = vector.broadcast %c0_i32_12 : i32 to vector<32x4xi32>
    %34 = arith.select %32, %27, %33 : vector<32x4xi1>, vector<32x4xi32>
    %c1_i32 = arith.constant 1 : i32
    %35 = vector.broadcast %c1_i32 : i32 to vector<32x4xi32>
    %36 = arith.shli %35, %34 : vector<32x4xi32>
    %c0_i32_13 = arith.constant 0 : i32
    %37 = vector.broadcast %c0_i32_13 : i32 to vector<32x4xi32>
    %38 = arith.select %32, %36, %37 : vector<32x4xi1>, vector<32x4xi32>
    %cst_14 = arith.constant 0.000000e+00 : f32
    %39 = vector.broadcast %cst_14 : f32 to vector<16x32xf32>
    %40 = arith.cmpf ogt, %16, %39 : vector<16x32xf32>
    %41 = arith.extui %40 : vector<16x32xi1> to vector<16x32xi32>
    %42 = arith.sitofp %41 : vector<16x32xi32> to vector<16x32xf32>
    %43 = arith.sitofp %38 : vector<32x4xi32> to vector<32x4xf32>
    %cst_15 = arith.constant dense<0.000000e+00> : vector<16x4xf32>
    %44 = tpu.matmul %42, %43, %cst_15 {dimension_numbers = #tpu.dot_dimension_numbers<[1], [0], [0], [1], [0, 0, 1, 1], [], []>} : vector<16x32xf32>, vector<32x4xf32>, vector<16x4xf32> -> vector<16x4xf32>
    %45 = arith.fptosi %44 : vector<16x4xf32> to vector<16x4xi32>
    %c0_16 = arith.constant 0 : index
    %c0_17 = arith.constant 0 : index
    %46 = vector.load %arg5[%c0_16, %c0_17] : memref<16x4xi32, #tpu.memory_space<vmem>>, vector<16x4xi32>
    tpu.vector_store %arg5[%c0_16, %c0_17], %45 {strides = array<i32>} : memref<16x4xi32, #tpu.memory_space<vmem>>, vector<16x4xi32>,
    %47 = arith.subf %16, %21 : vector<16x32xf32>
    %48 = arith.mulf %47, %47 : vector<16x32xf32>
    %cst_18 = arith.constant dense<0.000000e+00> : vector<16xf32>
    %49 = vector.multi_reduction <add>, %48, %cst_18 [1] : vector<16x32xf32> to vector<16xf32>
    %50 = vector.shape_cast %49 : vector<16xf32> to vector<16x1xf32>
    %51 = arith.mulf %50, %8 : vector<16x1xf32>
    %52 = vector.shape_cast %51 : vector<16x1xf32> to vector<1x16x1xf32>
    %cst_19 = arith.constant dense<0.000000e+00> : vector<1xf32>
    %53 = vector.multi_reduction <add>, %52, %cst_19 [1, 2] : vector<1x16x1xf32> to vector<1xf32>
    %54 = vector.shape_cast %53 : vector<1xf32> to vector<1x1x1xf32>
    %55 = vector.extract %54[0, 0, 0] : f32 from vector<1x1x1xf32>
    %cst_20 = arith.constant 0.000000e+00 : f32
    %56 = vector.broadcast %cst_20 : f32 to vector<1x256xf32>
    %57 = vector.extract_strided_slice %15 {offsets = [0, 0], sizes = [16, 256], strides = [1, 1]} : vector<16x1056xf32> to vector<16x256xf32>
    %cst_21 = arith.constant dense<0xFF800000> : vector<16xf32>
    %58 = vector.multi_reduction <maximumf>, %57, %cst_21 [1] : vector<16x256xf32> to vector<16xf32>
    %59 = vector.shape_cast %58 : vector<16xf32> to vector<16x1xf32>
    %60 = vector.broadcast %59 : vector<16x1xf32> to vector<16x256xf32>
    %61 = arith.subf %57, %60 : vector<16x256xf32>
    %62 = math.exp %61 : vector<16x256xf32>
    %cst_22 = arith.constant dense<0.000000e+00> : vector<16xf32>
    %63 = vector.multi_reduction <add>, %62, %cst_22 [1] : vector<16x256xf32> to vector<16xf32>
    %64 = vector.shape_cast %63 : vector<16xf32> to vector<16x1xf32>
    %65 = tpu.reciprocal %64 {approx = true} : vector<16x1xf32> -> vector<16x1xf32>
    %66 = vector.broadcast %65 : vector<16x1xf32> to vector<16x256xf32>
    %67 = arith.mulf %62, %66 : vector<16x256xf32>
    %68 = math.log %64 : vector<16x1xf32>
    %69 = arith.addf %59, %68 : vector<16x1xf32>
    %70 = arith.mulf %67, %57 : vector<16x256xf32>
    %cst_23 = arith.constant dense<0.000000e+00> : vector<16xf32>
    %71 = vector.multi_reduction <add>, %70, %cst_23 [1] : vector<16x256xf32> to vector<16xf32>
    %72 = vector.shape_cast %71 : vector<16xf32> to vector<16x1xf32>
    %73 = arith.subf %69, %72 : vector<16x1xf32>
    %74 = arith.mulf %73, %8 : vector<16x1xf32>
    %75 = vector.shape_cast %74 : vector<16x1xf32> to vector<1x16x1xf32>
    %cst_24 = arith.constant dense<0.000000e+00> : vector<1xf32>
    %76 = vector.multi_reduction <add>, %75, %cst_24 [1, 2] : vector<1x16x1xf32> to vector<1xf32>
    %77 = vector.shape_cast %76 : vector<1xf32> to vector<1x1x1xf32>
    %78 = vector.extract %77[0, 0, 0] : f32 from vector<1x1x1xf32>
    %cst_25 = arith.constant 0.000000e+00 : f32
    %79 = arith.addf %cst_25, %78 : f32
    %80 = vector.broadcast %8 : vector<16x1xf32> to vector<16x256xf32>
    %81 = arith.mulf %67, %80 : vector<16x256xf32>
    %cst_26 = arith.constant dense<0.000000e+00> : vector<256xf32>
    %82 = vector.multi_reduction <add>, %81, %cst_26 [0] : vector<16x256xf32> to vector<256xf32>
    %83 = vector.shape_cast %82 : vector<256xf32> to vector<1x256xf32>
    %84 = arith.addf %56, %83 : vector<1x256xf32>
    %85 = vector.extract_strided_slice %15 {offsets = [0, 256], sizes = [16, 256], strides = [1, 1]} : vector<16x1056xf32> to vector<16x256xf32>
    %cst_27 = arith.constant dense<0xFF800000> : vector<16xf32>
    %86 = vector.multi_reduction <maximumf>, %85, %cst_27 [1] : vector<16x256xf32> to vector<16xf32>
    %87 = vector.shape_cast %86 : vector<16xf32> to vector<16x1xf32>
    %88 = vector.broadcast %87 : vector<16x1xf32> to vector<16x256xf32>
    %89 = arith.subf %85, %88 : vector<16x256xf32>
    %90 = math.exp %89 : vector<16x256xf32>
    %cst_28 = arith.constant dense<0.000000e+00> : vector<16xf32>
    %91 = vector.multi_reduction <add>, %90, %cst_28 [1] : vector<16x256xf32> to vector<16xf32>
    %92 = vector.shape_cast %91 : vector<16xf32> to vector<16x1xf32>
    %93 = tpu.reciprocal %92 {approx = true} : vector<16x1xf32> -> vector<16x1xf32>
    %94 = vector.broadcast %93 : vector<16x1xf32> to vector<16x256xf32>
    %95 = arith.mulf %90, %94 : vector<16x256xf32>
    %96 = math.log %92 : vector<16x1xf32>
    %97 = arith.addf %87, %96 : vector<16x1xf32>
    %98 = arith.mulf %95, %85 : vector<16x256xf32>
    %cst_29 = arith.constant dense<0.000000e+00> : vector<16xf32>
    %99 = vector.multi_reduction <add>, %98, %cst_29 [1] : vector<16x256xf32> to vector<16xf32>
    %100 = vector.shape_cast %99 : vector<16xf32> to vector<16x1xf32>
    %101 = arith.subf %97, %100 : vector<16x1xf32>
    %102 = arith.mulf %101, %8 : vector<16x1xf32>
    %103 = vector.shape_cast %102 : vector<16x1xf32> to vector<1x16x1xf32>
    %cst_30 = arith.constant dense<0.000000e+00> : vector<1xf32>
    %104 = vector.multi_reduction <add>, %103, %cst_30 [1, 2] : vector<1x16x1xf32> to vector<1xf32>
    %105 = vector.shape_cast %104 : vector<1xf32> to vector<1x1x1xf32>
    %106 = vector.extract %105[0, 0, 0] : f32 from vector<1x1x1xf32>
    %107 = arith.addf %79, %106 : f32
    %108 = vector.broadcast %8 : vector<16x1xf32> to vector<16x256xf32>
    %109 = arith.mulf %95, %108 : vector<16x256xf32>
    %cst_31 = arith.constant dense<0.000000e+00> : vector<256xf32>
    %110 = vector.multi_reduction <add>, %109, %cst_31 [0] : vector<16x256xf32> to vector<256xf32>
    %111 = vector.shape_cast %110 : vector<256xf32> to vector<1x256xf32>
    %112 = arith.addf %84, %111 : vector<1x256xf32>
    %113 = vector.extract_strided_slice %15 {offsets = [0, 512], sizes = [16, 256], strides = [1, 1]} : vector<16x1056xf32> to vector<16x256xf32>
    %cst_32 = arith.constant dense<0xFF800000> : vector<16xf32>
    %114 = vector.multi_reduction <maximumf>, %113, %cst_32 [1] : vector<16x256xf32> to vector<16xf32>
    %115 = vector.shape_cast %114 : vector<16xf32> to vector<16x1xf32>
    %116 = vector.broadcast %115 : vector<16x1xf32> to vector<16x256xf32>
    %117 = arith.subf %113, %116 : vector<16x256xf32>
    %118 = math.exp %117 : vector<16x256xf32>
    %cst_33 = arith.constant dense<0.000000e+00> : vector<16xf32>
    %119 = vector.multi_reduction <add>, %118, %cst_33 [1] : vector<16x256xf32> to vector<16xf32>
    %120 = vector.shape_cast %119 : vector<16xf32> to vector<16x1xf32>
    %121 = tpu.reciprocal %120 {approx = true} : vector<16x1xf32> -> vector<16x1xf32>
    %122 = vector.broadcast %121 : vector<16x1xf32> to vector<16x256xf32>
    %123 = arith.mulf %118, %122 : vector<16x256xf32>
    %124 = math.log %120 : vector<16x1xf32>
    %125 = arith.addf %115, %124 : vector<16x1xf32>
    %126 = arith.mulf %123, %113 : vector<16x256xf32>
    %cst_34 = arith.constant dense<0.000000e+00> : vector<16xf32>
    %127 = vector.multi_reduction <add>, %126, %cst_34 [1] : vector<16x256xf32> to vector<16xf32>
    %128 = vector.shape_cast %127 : vector<16xf32> to vector<16x1xf32>
    %129 = arith.subf %125, %128 : vector<16x1xf32>
    %130 = arith.mulf %129, %8 : vector<16x1xf32>
    %131 = vector.shape_cast %130 : vector<16x1xf32> to vector<1x16x1xf32>
    %cst_35 = arith.constant dense<0.000000e+00> : vector<1xf32>
    %132 = vector.multi_reduction <add>, %131, %cst_35 [1, 2] : vector<1x16x1xf32> to vector<1xf32>
    %133 = vector.shape_cast %132 : vector<1xf32> to vector<1x1x1xf32>
    %134 = vector.extract %133[0, 0, 0] : f32 from vector<1x1x1xf32>
    %135 = arith.addf %107, %134 : f32
    %136 = vector.broadcast %8 : vector<16x1xf32> to vector<16x256xf32>
    %137 = arith.mulf %123, %136 : vector<16x256xf32>
    %cst_36 = arith.constant dense<0.000000e+00> : vector<256xf32>
    %138 = vector.multi_reduction <add>, %137, %cst_36 [0] : vector<16x256xf32> to vector<256xf32>
    %139 = vector.shape_cast %138 : vector<256xf32> to vector<1x256xf32>
    %140 = arith.addf %112, %139 : vector<1x256xf32>
    %141 = vector.extract_strided_slice %15 {offsets = [0, 768], sizes = [16, 256], strides = [1, 1]} : vector<16x1056xf32> to vector<16x256xf32>
    %cst_37 = arith.constant dense<0xFF800000> : vector<16xf32>
    %142 = vector.multi_reduction <maximumf>, %141, %cst_37 [1] : vector<16x256xf32> to vector<16xf32>
    %143 = vector.shape_cast %142 : vector<16xf32> to vector<16x1xf32>
    %144 = vector.broadcast %143 : vector<16x1xf32> to vector<16x256xf32>
    %145 = arith.subf %141, %144 : vector<16x256xf32>
    %146 = math.exp %145 : vector<16x256xf32>
    %cst_38 = arith.constant dense<0.000000e+00> : vector<16xf32>
    %147 = vector.multi_reduction <add>, %146, %cst_38 [1] : vector<16x256xf32> to vector<16xf32>
    %148 = vector.shape_cast %147 : vector<16xf32> to vector<16x1xf32>
    %149 = tpu.reciprocal %148 {approx = true} : vector<16x1xf32> -> vector<16x1xf32>
    %150 = vector.broadcast %149 : vector<16x1xf32> to vector<16x256xf32>
    %151 = arith.mulf %146, %150 : vector<16x256xf32>
    %152 = math.log %148 : vector<16x1xf32>
    %153 = arith.addf %143, %152 : vector<16x1xf32>
    %154 = arith.mulf %151, %141 : vector<16x256xf32>
    %cst_39 = arith.constant dense<0.000000e+00> : vector<16xf32>
    %155 = vector.multi_reduction <add>, %154, %cst_39 [1] : vector<16x256xf32> to vector<16xf32>
    %156 = vector.shape_cast %155 : vector<16xf32> to vector<16x1xf32>
    %157 = arith.subf %153, %156 : vector<16x1xf32>
    %158 = arith.mulf %157, %8 : vector<16x1xf32>
    %159 = vector.shape_cast %158 : vector<16x1xf32> to vector<1x16x1xf32>
    %cst_40 = arith.constant dense<0.000000e+00> : vector<1xf32>
    %160 = vector.multi_reduction <add>, %159, %cst_40 [1, 2] : vector<1x16x1xf32> to vector<1xf32>
    %161 = vector.shape_cast %160 : vector<1xf32> to vector<1x1x1xf32>
    %162 = vector.extract %161[0, 0, 0] : f32 from vector<1x1x1xf32>
    %163 = arith.addf %135, %162 : f32
    %164 = vector.broadcast %8 : vector<16x1xf32> to vector<16x256xf32>
    %165 = arith.mulf %151, %164 : vector<16x256xf32>
    %cst_41 = arith.constant dense<0.000000e+00> : vector<256xf32>
    %166 = vector.multi_reduction <add>, %165, %cst_41 [0] : vector<16x256xf32> to vector<256xf32>
    %167 = vector.shape_cast %166 : vector<256xf32> to vector<1x256xf32>
    %168 = arith.addf %140, %167 : vector<1x256xf32>
    %169 = tpu.iota {dimensions = array<i32: 0>} : vector<8x256xi32>
    %c0_i32_42 = arith.constant 0 : i32
    %170 = vector.broadcast %c0_i32_42 : i32 to vector<8x256xi32>
    %171 = arith.cmpi eq, %169, %170 : vector<8x256xi32>
    %cst_43 = arith.constant 0.000000e+00 : f32
    %172 = vector.shape_cast %168 : vector<1x256xf32> to vector<1x256xf32>
    %173 = vector.broadcast %172 : vector<1x256xf32> to vector<8x256xf32>
    %174 = vector.broadcast %cst_43 : f32 to vector<8x256xf32>
    %175 = arith.select %171, %173, %174 : vector<8x256xi1>, vector<8x256xf32>
    %c1_i32_44 = arith.constant 1 : i32
    %176 = vector.broadcast %c1_i32_44 : i32 to vector<8x256xi32>
    %177 = arith.cmpi eq, %169, %176 : vector<8x256xi32>
    %178 = vector.broadcast %163 : f32 to vector<8x256xf32>
    %179 = arith.select %177, %178, %175 : vector<8x256xi1>, vector<8x256xf32>
    %c2_i32 = arith.constant 2 : i32
    %180 = vector.broadcast %c2_i32 : i32 to vector<8x256xi32>
    %181 = arith.cmpi eq, %169, %180 : vector<8x256xi32>
    %182 = vector.broadcast %55 : f32 to vector<8x256xf32>
    %183 = arith.select %181, %182, %179 : vector<8x256xi1>, vector<8x256xf32>
    %c0_45 = arith.constant 0 : index
    %c0_46 = arith.constant 0 : index
    %c0_47 = arith.constant 0 : index
    %184 = vector.load %arg6[%c0_45, %c0_46, %c0_47] : memref<1x8x256xf32, #tpu.memory_space<vmem>>, vector<1x8x256xf32>
    %185 = vector.shape_cast %184 : vector<1x8x256xf32> to vector<8x256xf32>
    %186 = vector.shape_cast %183 : vector<8x256xf32> to vector<1x8x256xf32>
    tpu.vector_store %arg6[%c0_45, %c0_46, %c0_47], %186 {strides = array<i32>} : memref<1x8x256xf32, #tpu.memory_space<vmem>>, vector<1x8x256xf32>,
    return
  }
  func.func @transform_0(%arg0: i32) -> (i32, i32) {
    %c0_i32 = arith.constant 0 : i32
    %c0_i32_0 = arith.constant 0 : i32
    return %arg0, %c0_i32 : i32, i32
  }
  func.func @transform_1(%arg0: i32) -> (i32, i32) {
    %c0_i32 = arith.constant 0 : i32
    %c0_i32_0 = arith.constant 0 : i32
    %c0_i32_1 = arith.constant 0 : i32
    return %c0_i32, %c0_i32_0 : i32, i32
  }
  func.func @transform_2(%arg0: i32) -> (i32, i32) {
    %c0_i32 = arith.constant 0 : i32
    %c0_i32_0 = arith.constant 0 : i32
    %c0_i32_1 = arith.constant 0 : i32
    return %c0_i32, %c0_i32_0 : i32, i32
  }
  func.func @transform_3(%arg0: i32) -> (i32, i32) {
    %c0_i32 = arith.constant 0 : i32
    %c0_i32_0 = arith.constant 0 : i32
    return %arg0, %c0_i32 : i32, i32
  }
  func.func @transform_4(%arg0: i32) -> (i32, i32) {
    %c0_i32 = arith.constant 0 : i32
    %c0_i32_0 = arith.constant 0 : i32
    return %arg0, %c0_i32 : i32, i32
  }
  func.func @transform_5(%arg0: i32) -> (i32, i32, i32) {
    %c0_i32 = arith.constant 0 : i32
    %c0_i32_0 = arith.constant 0 : i32
    %c0_i32_1 = arith.constant 0 : i32
    return %arg0, %c0_i32, %c0_i32_0 : i32, i32, i32
  }
}

</mosaic_0001>

<llo_original>
// kernel: lfq_wrapper_forward.1
$region0: #{lfq_wrapper_forward.1}
  #allocation0 [shape = 'u32[]', space=smem, size = 0x4, offset = 0x4, fixed_abs, tag = 'smem constant byte address 0x4 - core index']
  #allocation1 [shape = 'u32[144,128]{1,0:T(1,128)}', space=vmem, size = 0x12000, scoped, tag = 'internal scratch']
  %s0 = inlined_call_operand.vmem [shape: f32[16,12], index: 0, kind: input, shape index: {}]
  %s1 = inlined_call_operand.vmem [shape: f32[12,1056], index: 1, kind: input, shape index: {}]
  %s2 = inlined_call_operand.vmem [shape: f32[1,1056], index: 2, kind: input, shape index: {}]
  %s3 = inlined_call_operand.vmem [shape: f32[16,32], index: 3, kind: output, shape index: {0}]
  %s4 = inlined_call_operand.vmem [shape: s32[16,4], index: 4, kind: output, shape index: {1}]
  %s5 = inlined_call_operand.vmem [shape: f32[1,8,256], index: 5, kind: output, shape index: {2}]
  %6 = xla_tuple %s3, %s4, %s5
  %s7 = sld [smem:[#allocation0]]
  $region38: #{lfq_wrapper_forward.1} parent=0
    _
  %s9 = ssub.s32 1, %s7
  %s10 = scalar_select 0, %s9, %s7
  // Predicated region
  $region2: #{lfq_wrapper_forward.1} parent=0 // pred_check
    _
  $region3: #{lfq_wrapper_forward.1} parent=0 // pred_check_branch
    %12 = sbr.rel (0) target = $region5
  $region4: #{lfq_wrapper_forward.1} parent=0 // pred_region
    _
  $region5: #{lfq_wrapper_forward.1} parent=0 // pred_fallthru
    _
  // Predicated region
  $region6: #{lfq_wrapper_forward.1} parent=0 // pred_check
    _
  $region7: #{lfq_wrapper_forward.1} parent=0 // pred_check_branch
    %14 = sbr.rel (0) target = $region9
  $region8: #{lfq_wrapper_forward.1} parent=0 // pred_region
    _
  $region9: #{lfq_wrapper_forward.1} parent=0 // pred_fallthru
    _
  // Predicated region
  $region10: #{lfq_wrapper_forward.1} parent=0 // pred_check
    _
  $region11: #{lfq_wrapper_forward.1} parent=0 // pred_check_branch
    %16 = sbr.rel (0) target = $region13
  $region12: #{lfq_wrapper_forward.1} parent=0 // pred_region
    _
  $region13: #{lfq_wrapper_forward.1} parent=0 // pred_fallthru
    _
  %v17 = vld [vmem:[%s0] sm:$0xff]
  %v18 = vld [vmem:[%s0 + $0x8] sm:$0xff]
  %s19 = smul.u32 0, 16
  %v20 = vlaneseq
  %v21 = vshrl.u32 %v20, 7
  %v22 = vadd.s32 %v21, 8
  %v23 = vstv %s19
  %v24 = vadd.s32 %v23, %v21
  %v25 = vadd.s32 %v23, %v22
  %vm26 = vcmp.lt.s32.totalorder %v24, 16
  %vm27 = vcmp.lt.s32.totalorder %v25, 16
  %v28 = vsel %vm26, 1, 0
  %v29 = vsel %vm27, 1, 0
  %v30 = vcvt.s32.f32 %v28
  %v31 = vcvt.s32.f32 %v29
  %v32 = vmul.f32 %v17, %v30
  %v33 = vmul.f32 %v18, %v31
  %v34 = vld [vmem:[%s1] sm:$0xff]
  %v35 = vld [vmem:[%s1 + $0x8] sm:$0xff]
  %v36 = vld [vmem:[%s1 + $0x10] sm:$0xff]
  %v37 = vld [vmem:[%s1 + $0x18] sm:$0xff]
  %v38 = vld [vmem:[%s1 + $0x20] sm:$0xff]
  %v39 = vld [vmem:[%s1 + $0x28] sm:$0xff]
  %v40 = vld [vmem:[%s1 + $0x30] sm:$0xff]
  %v41 = vld [vmem:[%s1 + $0x38] sm:$0xff]
  %v42 = vld [vmem:[%s1 + $0x40] sm:$0xff]
  %v43 = vld [vmem:[%s1 + $0x48] sm:$0xf]
  %v44 = vld [vmem:[%s1 + $0x50] sm:$0xf]
  %v45 = vld [vmem:[%s1 + $0x58] sm:$0xf]
  %v46 = vld [vmem:[%s1 + $0x60] sm:$0xf]
  %v47 = vld [vmem:[%s1 + $0x68] sm:$0xf]
  %v48 = vld [vmem:[%s1 + $0x70] sm:$0xf]
  %v49 = vld [vmem:[%s1 + $0x78] sm:$0xf]
  %v50 = vld [vmem:[%s1 + $0x80] sm:$0xf]
  %v51 = vld [vmem:[%s1 + $0x88] sm:$0xf]
  %v52 = vld [vmem:[%s2] sm:$0xff]
  %v53 = vld [vmem:[%s2 + $0x8] sm:$0x1]
  %v56 = vlaneseq
  %v57 = vshrl.u32 %v56, 7
  %v58 = vsub.s32 0, %v57
  %v59 = vrot.slane %v52, %v58
  %v60 = vlaneseq
  %v61 = vshrl.u32 %v60, 7
  %v62 = vsub.s32 1, %v61
  %v63 = vrot.slane %v52, %v62
  %v64 = vlaneseq
  %v65 = vshrl.u32 %v64, 7
  %v66 = vsub.s32 2, %v65
  %v67 = vrot.slane %v52, %v66
  %v68 = vlaneseq
  %v69 = vshrl.u32 %v68, 7
  %v70 = vsub.s32 3, %v69
  %v71 = vrot.slane %v52, %v70
  %v72 = vlaneseq
  %v73 = vshrl.u32 %v72, 7
  %v74 = vsub.s32 4, %v73
  %v75 = vrot.slane %v52, %v74
  %v76 = vlaneseq
  %v77 = vshrl.u32 %v76, 7
  %v78 = vsub.s32 5, %v77
  %v79 = vrot.slane %v52, %v78
  %v80 = vlaneseq
  %v81 = vshrl.u32 %v80, 7
  %v82 = vsub.s32 6, %v81
  %v83 = vrot.slane %v52, %v82
  %v84 = vlaneseq
  %v85 = vshrl.u32 %v84, 7
  %v86 = vsub.s32 7, %v85
  %v87 = vrot.slane %v52, %v86
  %v88 = vlaneseq
  %v89 = vshrl.u32 %v88, 7
  %v90 = vsub.s32 0, %v89
  %v91 = vrot.slane %v53, %v90
  %vm101 = vcmask 97280
  %v103 = vsel %vm101, %v32, 0
  %v106 = vsel %vm101, %v33, 0
  %vm108 = vcmask 1043456
  %v110 = vsel %vm108, %v43, 0
  %v113 = vsel %vm108, %v44, 0
  %v116 = vsel %vm108, %v45, 0
  %v119 = vsel %vm108, %v46, 0
  %v122 = vsel %vm108, %v47, 0
  %v125 = vsel %vm108, %v48, 0
  %v128 = vsel %vm108, %v49, 0
  %v131 = vsel %vm108, %v50, 0
  %v134 = vsel %vm108, %v51, 0
  %136 = vmatprep.subr.mxu0 %v35
  %137 = vmatpush1.msra.mxu0 %v34
  %138 = vmatprep.subr.mxu0 %v113
  %139 = vmatpush1.msra.mxu0 %v110
  %140 = vmatprep.subr.mxu0 0.0
  %141 = vmatpush1.msra.mxu0 0.0
  %142 = vmatprep.subr.mxu0 0.0
  %143 = vmatpush1.msra.mxu0 0.0
  %144 = vmatprep.subr.mxu0 0.0
  %145 = vmatpush1.msra.mxu0 0.0
  %146 = vmatprep.subr.mxu0 0.0
  %147 = vmatpush1.msra.mxu0 0.0
  %148 = vmatprep.subr.mxu0 0.0
  %149 = vmatpush1.msra.mxu0 0.0
  %150 = vmatprep.subr.mxu0 0.0
  %151 = vmatpush1.msra.mxu0 0.0
  %152 = vmatprep.subr.mxu0 0.0
  %153 = vmatpush1.msra.mxu0 0.0
  %154 = vmatprep.subr.mxu0 0.0
  %155 = vmatpush1.msra.mxu0 0.0
  %156 = vmatprep.subr.mxu0 0.0
  %157 = vmatpush1.msra.mxu0 0.0
  %158 = vmatprep.subr.mxu0 0.0
  %159 = vmatpush1.msra.mxu0 0.0
  %160 = vmatprep.subr.mxu0 0.0
  %161 = vmatpush1.msra.mxu0 0.0
  %162 = vmatprep.subr.mxu0 0.0
  %163 = vmatpush1.msra.mxu0 0.0
  %164 = vmatprep.subr.mxu0 0.0
  %165 = vmatpush1.msra.mxu0 0.0
  %166 = vmatprep.subr.mxu0 0.0
  %167 = vmatpush1.msra.mxu0 0.0
  %168 = vmatprep.subr.mxu0 0.0
  %169 = vmatpush1.msra.mxu0 0.0
  %170 = vmatprep.subr.mxu0 0.0
  %171 = vmatpush1.msra.mxu0 0.0
  %172 = vmatprep.subr.mxu0 0.0
  %173 = vmatpush1.msra.mxu0 0.0
  %174 = vmatprep.subr.mxu0 0.0
  %175 = vmatpush1.msra.mxu0 0.0
  %176 = vmatprep.subr.mxu0 0.0
  %177 = vmatpush1.msra.mxu0 0.0
  %178 = vmatprep.subr.mxu0 0.0
  %179 = vmatpush1.msra.mxu0 0.0
  %180 = vmatprep.subr.mxu0 0.0
  %181 = vmatpush1.msra.mxu0 0.0
  %182 = vmatprep.subr.mxu0 0.0
  %183 = vmatpush1.msra.mxu0 0.0
  %184 = vmatprep.subr.mxu0 0.0
  %185 = vmatpush1.msra.mxu0 0.0
  %186 = vmatprep.subr.mxu0 0.0
  %187 = vmatpush1.msra.mxu0 0.0
  %188 = vmatprep.subr.mxu0 0.0
  %189 = vmatpush1.msra.mxu0 0.0
  %190 = vmatprep.subr.mxu0 0.0
  %191 = vmatpush1.msra.mxu0 0.0
  %192 = vmatprep.subr.mxu0 0.0
  %193 = vmatpush1.msra.mxu0 0.0
  %194 = vmatprep.subr.mxu0 0.0
  %195 = vmatpush1.msra.mxu0 0.0
  %196 = vmatprep.subr.mxu0 0.0
  %197 = vmatpush1.msra.mxu0 0.0
  %198 = vmatprep.subr.mxu0 0.0
  %199 = vmatpush1.msra.mxu0 0.0
  %200 = vmatprep.mubr.f32.mxu0 0.0
  %201 = vmatmul.mubr.f32.gmra.mrb[0].mxu0 %v103
  %v202 = vpop.f32.mrb[0].mxu0
  %v203 = vadd.f32 %v59, %v202
  %v204 = vpop.f32.mrb[0].mxu0
  %v205 = vadd.f32 %v63, %v204
  %206 = vmatprep.mubr.f32.mxu0 0.0
  %207 = vmatmul.mubr.f32.gmra.mrb[0].mxu0 %v106
  %v208 = vpop.f32.mrb[0].mxu0
  %v209 = vadd.f32 %v59, %v208
  %v210 = vpop.f32.mrb[0].mxu0
  %v211 = vadd.f32 %v63, %v210
  %212 = vdwg.mxu0
  %213 = vmatprep.subr.mxu0 %v37
  %214 = vmatpush1.msra.mxu0 %v36
  %215 = vmatprep.subr.mxu0 %v119
  %216 = vmatpush1.msra.mxu0 %v116
  %217 = vmatprep.subr.mxu0 0.0
  %218 = vmatpush1.msra.mxu0 0.0
  %219 = vmatprep.subr.mxu0 0.0
  %220 = vmatpush1.msra.mxu0 0.0
  %221 = vmatprep.subr.mxu0 0.0
  %222 = vmatpush1.msra.mxu0 0.0
  %223 = vmatprep.subr.mxu0 0.0
  %224 = vmatpush1.msra.mxu0 0.0
  %225 = vmatprep.subr.mxu0 0.0
  %226 = vmatpush1.msra.mxu0 0.0
  %227 = vmatprep.subr.mxu0 0.0
  %228 = vmatpush1.msra.mxu0 0.0
  %229 = vmatprep.subr.mxu0 0.0
  %230 = vmatpush1.msra.mxu0 0.0
  %231 = vmatprep.subr.mxu0 0.0
  %232 = vmatpush1.msra.mxu0 0.0
  %233 = vmatprep.subr.mxu0 0.0
  %234 = vmatpush1.msra.mxu0 0.0
  %235 = vmatprep.subr.mxu0 0.0
  %236 = vmatpush1.msra.mxu0 0.0
  %237 = vmatprep.subr.mxu0 0.0
  %238 = vmatpush1.msra.mxu0 0.0
  %239 = vmatprep.subr.mxu0 0.0
  %240 = vmatpush1.msra.mxu0 0.0
  %241 = vmatprep.subr.mxu0 0.0
  %242 = vmatpush1.msra.mxu0 0.0
  %243 = vmatprep.subr.mxu0 0.0
  %244 = vmatpush1.msra.mxu0 0.0
  %245 = vmatprep.subr.mxu0 0.0
  %246 = vmatpush1.msra.mxu0 0.0
  %247 = vmatprep.subr.mxu0 0.0
  %248 = vmatpush1.msra.mxu0 0.0
  %249 = vmatprep.subr.mxu0 0.0
  %250 = vmatpush1.msra.mxu0 0.0
  %251 = vmatprep.subr.mxu0 0.0
  %252 = vmatpush1.msra.mxu0 0.0
  %253 = vmatprep.subr.mxu0 0.0
  %254 = vmatpush1.msra.mxu0 0.0
  %255 = vmatprep.subr.mxu0 0.0
  %256 = vmatpush1.msra.mxu0 0.0
  %257 = vmatprep.subr.mxu0 0.0
  %258 = vmatpush1.msra.mxu0 0.0
  %259 = vmatprep.subr.mxu0 0.0
  %260 = vmatpush1.msra.mxu0 0.0
  %261 = vmatprep.subr.mxu0 0.0
  %262 = vmatpush1.msra.mxu0 0.0
  %263 = vmatprep.subr.mxu0 0.0
  %264 = vmatpush1.msra.mxu0 0.0
  %265 = vmatprep.subr.mxu0 0.0
  %266 = vmatpush1.msra.mxu0 0.0
  %267 = vmatprep.subr.mxu0 0.0
  %268 = vmatpush1.msra.mxu0 0.0
  %269 = vmatprep.subr.mxu0 0.0
  %270 = vmatpush1.msra.mxu0 0.0
  %271 = vmatprep.subr.mxu0 0.0
  %272 = vmatpush1.msra.mxu0 0.0
  %273 = vmatprep.subr.mxu0 0.0
  %274 = vmatpush1.msra.mxu0 0.0
  %275 = vmatprep.subr.mxu0 0.0
  %276 = vmatpush1.msra.mxu0 0.0
  %277 = vmatprep.mubr.f32.mxu0 0.0
  %278 = vmatmul.mubr.f32.gmra.mrb[0].mxu0 %v103
  %v279 = vpop.f32.mrb[0].mxu0
  %v280 = vadd.f32 %v67, %v279
  %v281 = vpop.f32.mrb[0].mxu0
  %v282 = vadd.f32 %v71, %v281
  %283 = vmatprep.mubr.f32.mxu0 0.0
  %284 = vmatmul.mubr.f32.gmra.mrb[0].mxu0 %v106
  %v285 = vpop.f32.mrb[0].mxu0
  %v286 = vadd.f32 %v67, %v285
  %v287 = vpop.f32.mrb[0].mxu0
  %v288 = vadd.f32 %v71, %v287
  %289 = vdwg.mxu0
  %290 = vmatprep.subr.mxu0 %v39
  %291 = vmatpush1.msra.mxu0 %v38
  %292 = vmatprep.subr.mxu0 %v125
  %293 = vmatpush1.msra.mxu0 %v122
  %294 = vmatprep.subr.mxu0 0.0
  %295 = vmatpush1.msra.mxu0 0.0
  %296 = vmatprep.subr.mxu0 0.0
  %297 = vmatpush1.msra.mxu0 0.0
  %298 = vmatprep.subr.mxu0 0.0
  %299 = vmatpush1.msra.mxu0 0.0
  %300 = vmatprep.subr.mxu0 0.0
  %301 = vmatpush1.msra.mxu0 0.0
  %302 = vmatprep.subr.mxu0 0.0
  %303 = vmatpush1.msra.mxu0 0.0
  %304 = vmatprep.subr.mxu0 0.0
  %305 = vmatpush1.msra.mxu0 0.0
  %306 = vmatprep.subr.mxu0 0.0
  %307 = vmatpush1.msra.mxu0 0.0
  %308 = vmatprep.subr.mxu0 0.0
  %309 = vmatpush1.msra.mxu0 0.0
  %310 = vmatprep.subr.mxu0 0.0
  %311 = vmatpush1.msra.mxu0 0.0
  %312 = vmatprep.subr.mxu0 0.0
  %313 = vmatpush1.msra.mxu0 0.0
  %314 = vmatprep.subr.mxu0 0.0
  %315 = vmatpush1.msra.mxu0 0.0
  %316 = vmatprep.subr.mxu0 0.0
  %317 = vmatpush1.msra.mxu0 0.0
  %318 = vmatprep.subr.mxu0 0.0
  %319 = vmatpush1.msra.mxu0 0.0
  %320 = vmatprep.subr.mxu0 0.0
  %321 = vmatpush1.msra.mxu0 0.0
  %322 = vmatprep.subr.mxu0 0.0
  %323 = vmatpush1.msra.mxu0 0.0
  %324 = vmatprep.subr.mxu0 0.0
  %325 = vmatpush1.msra.mxu0 0.0
  %326 = vmatprep.subr.mxu0 0.0
  %327 = vmatpush1.msra.mxu0 0.0
  %328 = vmatprep.subr.mxu0 0.0
  %329 = vmatpush1.msra.mxu0 0.0
  %330 = vmatprep.subr.mxu0 0.0
  %331 = vmatpush1.msra.mxu0 0.0
  %332 = vmatprep.subr.mxu0 0.0
  %333 = vmatpush1.msra.mxu0 0.0
  %334 = vmatprep.subr.mxu0 0.0
  %335 = vmatpush1.msra.mxu0 0.0
  %336 = vmatprep.subr.mxu0 0.0
  %337 = vmatpush1.msra.mxu0 0.0
  %338 = vmatprep.subr.mxu0 0.0
  %339 = vmatpush1.msra.mxu0 0.0
  %340 = vmatprep.subr.mxu0 0.0
  %341 = vmatpush1.msra.mxu0 0.0
  %342 = vmatprep.subr.mxu0 0.0
  %343 = vmatpush1.msra.mxu0 0.0
  %344 = vmatprep.subr.mxu0 0.0
  %345 = vmatpush1.msra.mxu0 0.0
  %346 = vmatprep.subr.mxu0 0.0
  %347 = vmatpush1.msra.mxu0 0.0
  %348 = vmatprep.subr.mxu0 0.0
  %349 = vmatpush1.msra.mxu0 0.0
  %350 = vmatprep.subr.mxu0 0.0
  %351 = vmatpush1.msra.mxu0 0.0
  %352 = vmatprep.subr.mxu0 0.0
  %353 = vmatpush1.msra.mxu0 0.0
  %354 = vmatprep.mubr.f32.mxu0 0.0
  %355 = vmatmul.mubr.f32.gmra.mrb[0].mxu0 %v103
  %v356 = vpop.f32.mrb[0].mxu0
  %v357 = vadd.f32 %v75, %v356
  %v358 = vpop.f32.mrb[0].mxu0
  %v359 = vadd.f32 %v79, %v358
  %360 = vmatprep.mubr.f32.mxu0 0.0
  %361 = vmatmul.mubr.f32.gmra.mrb[0].mxu0 %v106
  %v362 = vpop.f32.mrb[0].mxu0
  %v363 = vadd.f32 %v75, %v362
  %v364 = vpop.f32.mrb[0].mxu0
  %v365 = vadd.f32 %v79, %v364
  %366 = vdwg.mxu0
  %367 = vmatprep.subr.mxu0 %v41
  %368 = vmatpush1.msra.mxu0 %v40
  %369 = vmatprep.subr.mxu0 %v131
  %370 = vmatpush1.msra.mxu0 %v128
  %371 = vmatprep.subr.mxu0 0.0
  %372 = vmatpush1.msra.mxu0 0.0
  %373 = vmatprep.subr.mxu0 0.0
  %374 = vmatpush1.msra.mxu0 0.0
  %375 = vmatprep.subr.mxu0 0.0
  %376 = vmatpush1.msra.mxu0 0.0
  %377 = vmatprep.subr.mxu0 0.0
  %378 = vmatpush1.msra.mxu0 0.0
  %379 = vmatprep.subr.mxu0 0.0
  %380 = vmatpush1.msra.mxu0 0.0
  %381 = vmatprep.subr.mxu0 0.0
  %382 = vmatpush1.msra.mxu0 0.0
  %383 = vmatprep.subr.mxu0 0.0
  %384 = vmatpush1.msra.mxu0 0.0
  %385 = vmatprep.subr.mxu0 0.0
  %386 = vmatpush1.msra.mxu0 0.0
  %387 = vmatprep.subr.mxu0 0.0
  %388 = vmatpush1.msra.mxu0 0.0
  %389 = vmatprep.subr.mxu0 0.0
  %390 = vmatpush1.msra.mxu0 0.0
  %391 = vmatprep.subr.mxu0 0.0
  %392 = vmatpush1.msra.mxu0 0.0
  %393 = vmatprep.subr.mxu0 0.0
  %394 = vmatpush1.msra.mxu0 0.0
  %395 = vmatprep.subr.mxu0 0.0
  %396 = vmatpush1.msra.mxu0 0.0
  %397 = vmatprep.subr.mxu0 0.0
  %398 = vmatpush1.msra.mxu0 0.0
  %399 = vmatprep.subr.mxu0 0.0
  %400 = vmatpush1.msra.mxu0 0.0
  %401 = vmatprep.subr.mxu0 0.0
  %402 = vmatpush1.msra.mxu0 0.0
  %403 = vmatprep.subr.mxu0 0.0
  %404 = vmatpush1.msra.mxu0 0.0
  %405 = vmatprep.subr.mxu0 0.0
  %406 = vmatpush1.msra.mxu0 0.0
  %407 = vmatprep.subr.mxu0 0.0
  %408 = vmatpush1.msra.mxu0 0.0
  %409 = vmatprep.subr.mxu0 0.0
  %410 = vmatpush1.msra.mxu0 0.0
  %411 = vmatprep.subr.mxu0 0.0
  %412 = vmatpush1.msra.mxu0 0.0
  %413 = vmatprep.subr.mxu0 0.0
  %414 = vmatpush1.msra.mxu0 0.0
  %415 = vmatprep.subr.mxu0 0.0
  %416 = vmatpush1.msra.mxu0 0.0
  %417 = vmatprep.subr.mxu0 0.0
  %418 = vmatpush1.msra.mxu0 0.0
  %419 = vmatprep.subr.mxu0 0.0
  %420 = vmatpush1.msra.mxu0 0.0
  %421 = vmatprep.subr.mxu0 0.0
  %422 = vmatpush1.msra.mxu0 0.0
  %423 = vmatprep.subr.mxu0 0.0
  %424 = vmatpush1.msra.mxu0 0.0
  %425 = vmatprep.subr.mxu0 0.0
  %426 = vmatpush1.msra.mxu0 0.0
  %427 = vmatprep.subr.mxu0 0.0
  %428 = vmatpush1.msra.mxu0 0.0
  %429 = vmatprep.subr.mxu0 0.0
  %430 = vmatpush1.msra.mxu0 0.0
  %431 = vmatprep.mubr.f32.mxu0 0.0
  %432 = vmatmul.mubr.f32.gmra.mrb[0].mxu0 %v103
  %v433 = vpop.f32.mrb[0].mxu0
  %v434 = vadd.f32 %v83, %v433
  %v435 = vpop.f32.mrb[0].mxu0
  %v436 = vadd.f32 %v87, %v435
  %437 = vmatprep.mubr.f32.mxu0 0.0
  %438 = vmatmul.mubr.f32.gmra.mrb[0].mxu0 %v106
  %v439 = vpop.f32.mrb[0].mxu0
  %v440 = vadd.f32 %v83, %v439
  %v441 = vpop.f32.mrb[0].mxu0
  %v442 = vadd.f32 %v87, %v441
  %443 = vdwg.mxu0
  %444 = vmatprep.subr.mxu0 0.0
  %445 = vmatpush1.msra.mxu0 %v42
  %446 = vmatprep.subr.mxu0 0.0
  %447 = vmatpush1.msra.mxu0 %v134
  %448 = vmatprep.subr.mxu0 0.0
  %449 = vmatpush1.msra.mxu0 0.0
  %450 = vmatprep.subr.mxu0 0.0
  %451 = vmatpush1.msra.mxu0 0.0
  %452 = vmatprep.subr.mxu0 0.0
  %453 = vmatpush1.msra.mxu0 0.0
  %454 = vmatprep.subr.mxu0 0.0
  %455 = vmatpush1.msra.mxu0 0.0
  %456 = vmatprep.subr.mxu0 0.0
  %457 = vmatpush1.msra.mxu0 0.0
  %458 = vmatprep.subr.mxu0 0.0
  %459 = vmatpush1.msra.mxu0 0.0
  %460 = vmatprep.subr.mxu0 0.0
  %461 = vmatpush1.msra.mxu0 0.0
  %462 = vmatprep.subr.mxu0 0.0
  %463 = vmatpush1.msra.mxu0 0.0
  %464 = vmatprep.subr.mxu0 0.0
  %465 = vmatpush1.msra.mxu0 0.0
  %466 = vmatprep.subr.mxu0 0.0
  %467 = vmatpush1.msra.mxu0 0.0
  %468 = vmatprep.subr.mxu0 0.0
  %469 = vmatpush1.msra.mxu0 0.0
  %470 = vmatprep.subr.mxu0 0.0
  %471 = vmatpush1.msra.mxu0 0.0
  %472 = vmatprep.subr.mxu0 0.0
  %473 = vmatpush1.msra.mxu0 0.0
  %474 = vmatprep.subr.mxu0 0.0
  %475 = vmatpush1.msra.mxu0 0.0
  %476 = vmatprep.subr.mxu0 0.0
  %477 = vmatpush1.msra.mxu0 0.0
  %478 = vmatprep.subr.mxu0 0.0
  %479 = vmatpush1.msra.mxu0 0.0
  %480 = vmatprep.subr.mxu0 0.0
  %481 = vmatpush1.msra.mxu0 0.0
  %482 = vmatprep.subr.mxu0 0.0
  %483 = vmatpush1.msra.mxu0 0.0
  %484 = vmatprep.subr.mxu0 0.0
  %485 = vmatpush1.msra.mxu0 0.0
  %486 = vmatprep.subr.mxu0 0.0
  %487 = vmatpush1.msra.mxu0 0.0
  %488 = vmatprep.subr.mxu0 0.0
  %489 = vmatpush1.msra.mxu0 0.0
  %490 = vmatprep.subr.mxu0 0.0
  %491 = vmatpush1.msra.mxu0 0.0
  %492 = vmatprep.subr.mxu0 0.0
  %493 = vmatpush1.msra.mxu0 0.0
  %494 = vmatprep.subr.mxu0 0.0
  %495 = vmatpush1.msra.mxu0 0.0
  %496 = vmatprep.subr.mxu0 0.0
  %497 = vmatpush1.msra.mxu0 0.0
  %498 = vmatprep.subr.mxu0 0.0
  %499 = vmatpush1.msra.mxu0 0.0
  %500 = vmatprep.subr.mxu0 0.0
  %501 = vmatpush1.msra.mxu0 0.0
  %502 = vmatprep.subr.mxu0 0.0
  %503 = vmatpush1.msra.mxu0 0.0
  %504 = vmatprep.subr.mxu0 0.0
  %505 = vmatpush1.msra.mxu0 0.0
  %506 = vmatprep.subr.mxu0 0.0
  %507 = vmatpush1.msra.mxu0 0.0
  %508 = vmatprep.mubr.f32.mxu0 0.0
  %509 = vmatmul.mubr.f32.gmra.mrb[0].mxu0 %v103
  %v510 = vpop.f32.mrb[0].mxu0
  %v511 = vadd.f32 %v91, %v510
  %v512 = vpop.f32.mrb[0].mxu0
  %513 = vmatprep.mubr.f32.mxu0 0.0
  %514 = vmatmul.mubr.f32.gmra.mrb[0].mxu0 %v106
  %v515 = vpop.f32.mrb[0].mxu0
  %v516 = vadd.f32 %v91, %v515
  %v517 = vpop.f32.mrb[0].mxu0
  %518 = vdwg.mxu0
  %vm519 = vcmp.gt.f32.partialorder %v511, 0.0
  %vm520 = vcmp.gt.f32.partialorder %v516, 0.0
  %v521 = vsel %vm519, 1.0, -1.0
  %v522 = vsel %vm520, 1.0, -1.0
  %vm523 = vcmask 261120
  %524 = vst.msk [vmem:[%s3] sm:$0xff] %vm523, %v521
  %525 = vst.msk [vmem:[%s3 + $0x8] sm:$0xff] %vm523, %v522
  %v526 = vadd.s32 %v21, 16
  %v527 = vadd.s32 %v21, 24
  %v528 = vlaneseq
  %v529 = vand.u32 %v528, 127
  %v530 = vmul.u32 %v529, 8
  %v531 = vsub.s32 %v21, %v530
  %v532 = vsub.s32 %v22, %v530
  %v533 = vsub.s32 %v526, %v530
  %v534 = vsub.s32 %v527, %v530
  %vm535 = vcmp.ge.s32.totalorder %v531, 0
  %vm536 = vcmp.ge.s32.totalorder %v532, 0
  %vm537 = vcmp.ge.s32.totalorder %v533, 0
  %vm538 = vcmp.ge.s32.totalorder %v534, 0
  %vm539 = vcmp.lt.s32.totalorder %v531, 8
  %vm540 = vcmp.lt.s32.totalorder %v532, 8
  %vm541 = vcmp.lt.s32.totalorder %v533, 8
  %vm542 = vcmp.lt.s32.totalorder %v534, 8
  %vm543 = vmand %vm535, %vm539
  %vm544 = vmand %vm536, %vm540
  %vm545 = vmand %vm537, %vm541
  %vm546 = vmand %vm538, %vm542
  %v547 = vsel %vm543, %v531, 0
  %v548 = vsel %vm544, %v532, 0
  %v549 = vsel %vm545, %v533, 0
  %v550 = vsel %vm546, %v534, 0
  %v551 = vshll.u32 1, %v547
  %v552 = vshll.u32 1, %v548
  %v553 = vshll.u32 1, %v549
  %v554 = vshll.u32 1, %v550
  %v555 = vsel %vm543, %v551, 0
  %v556 = vsel %vm544, %v552, 0
  %v557 = vsel %vm545, %v553, 0
  %v558 = vsel %vm546, %v554, 0
  %v559 = vsel %vm519, 1, 0
  %v560 = vsel %vm520, 1, 0
  %v561 = vcvt.s32.f32 %v559
  %v562 = vcvt.s32.f32 %v560
  %v563 = vcvt.s32.f32 %v555
  %v564 = vcvt.s32.f32 %v556
  %v565 = vcvt.s32.f32 %v557
  %v566 = vcvt.s32.f32 %v558
  %v568 = vsel %vm523, %v561, 0
  %v571 = vsel %vm523, %v562, 0
  %573 = vmatprep.subr.mxu0 0.0
  %574 = vmatpush1.msra.mxu0 %v563
  %575 = vmatprep.subr.mxu0 0.0
  %576 = vmatpush1.msra.mxu0 %v564
  %577 = vmatprep.subr.mxu0 0.0
  %578 = vmatpush1.msra.mxu0 %v565
  %579 = vmatprep.subr.mxu0 0.0
  %580 = vmatpush1.msra.mxu0 %v566
  %581 = vmatprep.subr.mxu0 0.0
  %582 = vmatpush1.msra.mxu0 0.0
  %583 = vmatprep.subr.mxu0 0.0
  %584 = vmatpush1.msra.mxu0 0.0
  %585 = vmatprep.subr.mxu0 0.0
  %586 = vmatpush1.msra.mxu0 0.0
  %587 = vmatprep.subr.mxu0 0.0
  %588 = vmatpush1.msra.mxu0 0.0
  %589 = vmatprep.subr.mxu0 0.0
  %590 = vmatpush1.msra.mxu0 0.0
  %591 = vmatprep.subr.mxu0 0.0
  %592 = vmatpush1.msra.mxu0 0.0
  %593 = vmatprep.subr.mxu0 0.0
  %594 = vmatpush1.msra.mxu0 0.0
  %595 = vmatprep.subr.mxu0 0.0
  %596 = vmatpush1.msra.mxu0 0.0
  %597 = vmatprep.subr.mxu0 0.0
  %598 = vmatpush1.msra.mxu0 0.0
  %599 = vmatprep.subr.mxu0 0.0
  %600 = vmatpush1.msra.mxu0 0.0
  %601 = vmatprep.subr.mxu0 0.0
  %602 = vmatpush1.msra.mxu0 0.0
  %603 = vmatprep.subr.mxu0 0.0
  %604 = vmatpush1.msra.mxu0 0.0
  %605 = vmatprep.subr.mxu0 0.0
  %606 = vmatpush1.msra.mxu0 0.0
  %607 = vmatprep.subr.mxu0 0.0
  %608 = vmatpush1.msra.mxu0 0.0
  %609 = vmatprep.subr.mxu0 0.0
  %610 = vmatpush1.msra.mxu0 0.0
  %611 = vmatprep.subr.mxu0 0.0
  %612 = vmatpush1.msra.mxu0 0.0
  %613 = vmatprep.subr.mxu0 0.0
  %614 = vmatpush1.msra.mxu0 0.0
  %615 = vmatprep.subr.mxu0 0.0
  %616 = vmatpush1.msra.mxu0 0.0
  %617 = vmatprep.subr.mxu0 0.0
  %618 = vmatpush1.msra.mxu0 0.0
  %619 = vmatprep.subr.mxu0 0.0
  %620 = vmatpush1.msra.mxu0 0.0
  %621 = vmatprep.subr.mxu0 0.0
  %622 = vmatpush1.msra.mxu0 0.0
  %623 = vmatprep.subr.mxu0 0.0
  %624 = vmatpush1.msra.mxu0 0.0
  %625 = vmatprep.subr.mxu0 0.0
  %626 = vmatpush1.msra.mxu0 0.0
  %627 = vmatprep.subr.mxu0 0.0
  %628 = vmatpush1.msra.mxu0 0.0
  %629 = vmatprep.subr.mxu0 0.0
  %630 = vmatpush1.msra.mxu0 0.0
  %631 = vmatprep.subr.mxu0 0.0
  %632 = vmatpush1.msra.mxu0 0.0
  %633 = vmatprep.subr.mxu0 0.0
  %634 = vmatpush1.msra.mxu0 0.0
  %635 = vmatprep.subr.mxu0 0.0
  %636 = vmatpush1.msra.mxu0 0.0
  %637 = vmatprep.mubr.f32.mxu0 0.0
  %638 = vmatmul.mubr.f32.gmra.mrb[0].mxu0 %v568
  %v639 = vpop.f32.mrb[0].mxu0
  %v640 = vadd.f32 0.0, %v639
  %v641 = vpop.f32.mrb[0].mxu0
  %642 = vmatprep.mubr.f32.mxu0 0.0
  %643 = vmatmul.mubr.f32.gmra.mrb[0].mxu0 %v571
  %v644 = vpop.f32.mrb[0].mxu0
  %v645 = vadd.f32 0.0, %v644
  %v646 = vpop.f32.mrb[0].mxu0
  %647 = vdwg.mxu0
  %v648 = vcvt.f32.s32.to.zero.pseudo %v640
  %v649 = vcvt.f32.s32.to.zero.pseudo %v645
  %vm650 = vcmask 31744
  %651 = vst.msk [vmem:[%s4] sm:$0xff] %vm650, %v648
  %652 = vst.msk [vmem:[%s4 + $0x8] sm:$0xff] %vm650, %v649
  %v653 = vsub.f32 %v511, %v521
  %v654 = vsub.f32 %v516, %v522
  %v655 = vmul.f32 %v653, %v653
  %v656 = vmul.f32 %v654, %v654
  %v657 = vsel %vm523, %v655, 0.0
  %658 = vadd.xlane.f32.xlu0 %v657
  %v659 = vpop.xlane.xlu0 %658
  %v660 = vsel %vm523, %v656, 0.0
  %661 = vadd.xlane.f32.xlu0 %v660
  %v662 = vpop.xlane.xlu0 %661
  %v663 = vmul.f32 %v659, %v30
  %v664 = vmul.f32 %v662, %v31
  %vm665 = vcmask 7168
  %v666 = vsel %vm665, %v663, 0.0
  %v667 = vsel %vm665, %v664, 0.0
  %v668 = vadd.f32 %v666, %v667
  %669 = vadd.xlane.f32.xlu0 %v668
  %v670 = vpop.xlane.xlu0 %669
  %v671 = vrot.slane %v670, 4
  %v672 = vadd.f32 %v670, %v671
  %v673 = vrot.slane %v672, 2
  %v674 = vadd.f32 %v672, %v673
  %v675 = vrot.slane %v674, 1
  %v676 = vadd.f32 %v674, %v675
  %s677 = vtos %v676
  %v678 = vmax.f32 %v203, %v205
  %679 = vmax.xlane.f32.xlu0 %v678
  %v680 = vpop.xlane.xlu0 %679
  %v681 = vmax.f32 %v209, %v211
  %682 = vmax.xlane.f32.xlu0 %v681
  %v683 = vpop.xlane.xlu0 %682
  %v684 = vsub.f32 %v203, %v680
  %v685 = vsub.f32 %v205, %v680
  %v686 = vsub.f32 %v209, %v683
  %v687 = vsub.f32 %v211, %v683
  %v688 = vmul.f32 %v684, 1.442695
  %v689 = vpow.pop %v688
  %v690 = vmul.f32 %v685, 1.442695
  %v691 = vpow.pop %v690
  %v692 = vmul.f32 %v686, 1.442695
  %v693 = vpow.pop %v692
  %v694 = vmul.f32 %v687, 1.442695
  %v695 = vpow.pop %v694
  %v696 = vadd.f32 %v689, %v691
  %697 = vadd.xlane.f32.xlu0 %v696
  %v698 = vpop.xlane.xlu0 %697
  %v699 = vadd.f32 %v693, %v695
  %700 = vadd.xlane.f32.xlu0 %v699
  %v701 = vpop.xlane.xlu0 %700
  %v702 = vrcp.pop %v698
  %v703 = vrcp.pop %v701
  %v704 = vmul.f32 %v689, %v702
  %v705 = vmul.f32 %v691, %v702
  %v706 = vmul.f32 %v693, %v703
  %v707 = vmul.f32 %v695, %v703
  %v708 = vlog2.pop %v698
  %v709 = vmul.f32 %v708, 0.6931472
  %v710 = vlog2.pop %v701
  %v711 = vmul.f32 %v710, 0.6931472
  %v712 = vadd.f32 %v680, %v709
  %v713 = vadd.f32 %v683, %v711
  %v714 = vmul.f32 %v704, %v203
  %v715 = vmul.f32 %v705, %v205
  %v716 = vmul.f32 %v706, %v209
  %v717 = vmul.f32 %v707, %v211
  %v718 = vadd.f32 %v714, %v715
  %719 = vadd.xlane.f32.xlu0 %v718
  %v720 = vpop.xlane.xlu0 %719
  %v721 = vadd.f32 %v716, %v717
  %722 = vadd.xlane.f32.xlu0 %v721
  %v723 = vpop.xlane.xlu0 %722
  %v724 = vsub.f32 %v712, %v720
  %v725 = vsub.f32 %v713, %v723
  %v726 = vmul.f32 %v724, %v30
  %v727 = vmul.f32 %v725, %v31
  %v728 = vsel %vm665, %v726, 0.0
  %v729 = vsel %vm665, %v727, 0.0
  %v730 = vadd.f32 %v728, %v729
  %731 = vadd.xlane.f32.xlu0 %v730
  %v732 = vpop.xlane.xlu0 %731
  %v733 = vrot.slane %v732, 4
  %v734 = vadd.f32 %v732, %v733
  %v735 = vrot.slane %v734, 2
  %v736 = vadd.f32 %v734, %v735
  %v737 = vrot.slane %v736, 1
  %v738 = vadd.f32 %v736, %v737
  %s739 = vtos %v738
  %s740 = sadd.f32 %s739, 0.0
  %v741 = vmul.f32 %v704, %v30
  %v742 = vmul.f32 %v705, %v30
  %v743 = vmul.f32 %v706, %v31
  %v744 = vmul.f32 %v707, %v31
  %v745 = vadd.f32 %v741, %v743
  %v746 = vrot.slane %v745, 4
  %v747 = vadd.f32 %v745, %v746
  %v748 = vrot.slane %v747, 2
  %v749 = vadd.f32 %v747, %v748
  %v750 = vrot.slane %v749, 1
  %v751 = vadd.f32 %v749, %v750
  %v752 = vadd.f32 %v742, %v744
  %v753 = vrot.slane %v752, 4
  %v754 = vadd.f32 %v752, %v753
  %v755 = vrot.slane %v754, 2
  %v756 = vadd.f32 %v754, %v755
  %v757 = vrot.slane %v756, 1
  %v758 = vadd.f32 %v756, %v757
  %v759 = vadd.f32 %v751, 0.0
  %v760 = vadd.f32 %v758, 0.0
  %v761 = vmax.f32 %v280, %v282
  %762 = vmax.xlane.f32.xlu0 %v761
  %v763 = vpop.xlane.xlu0 %762
  %v764 = vmax.f32 %v286, %v288
  %765 = vmax.xlane.f32.xlu0 %v764
  %v766 = vpop.xlane.xlu0 %765
  %v767 = vsub.f32 %v280, %v763
  %v768 = vsub.f32 %v282, %v763
  %v769 = vsub.f32 %v286, %v766
  %v770 = vsub.f32 %v288, %v766
  %v771 = vmul.f32 %v767, 1.442695
  %v772 = vpow.pop %v771
  %v773 = vmul.f32 %v768, 1.442695
  %v774 = vpow.pop %v773
  %v775 = vmul.f32 %v769, 1.442695
  %v776 = vpow.pop %v775
  %v777 = vmul.f32 %v770, 1.442695
  %v778 = vpow.pop %v777
  %v779 = vadd.f32 %v772, %v774
  %780 = vadd.xlane.f32.xlu0 %v779
  %v781 = vpop.xlane.xlu0 %780
  %v782 = vadd.f32 %v776, %v778
  %783 = vadd.xlane.f32.xlu0 %v782
  %v784 = vpop.xlane.xlu0 %783
  %v785 = vrcp.pop %v781
  %v786 = vrcp.pop %v784
  %v787 = vmul.f32 %v772, %v785
  %v788 = vmul.f32 %v774, %v785
  %v789 = vmul.f32 %v776, %v786
  %v790 = vmul.f32 %v778, %v786
  %v791 = vlog2.pop %v781
  %v792 = vmul.f32 %v791, 0.6931472
  %v793 = vlog2.pop %v784
  %v794 = vmul.f32 %v793, 0.6931472
  %v795 = vadd.f32 %v763, %v792
  %v796 = vadd.f32 %v766, %v794
  %v797 = vmul.f32 %v787, %v280
  %v798 = vmul.f32 %v788, %v282
  %v799 = vmul.f32 %v789, %v286
  %v800 = vmul.f32 %v790, %v288
  %v801 = vadd.f32 %v797, %v798
  %802 = vadd.xlane.f32.xlu0 %v801
  %v803 = vpop.xlane.xlu0 %802
  %v804 = vadd.f32 %v799, %v800
  %805 = vadd.xlane.f32.xlu0 %v804
  %v806 = vpop.xlane.xlu0 %805
  %v807 = vsub.f32 %v795, %v803
  %v808 = vsub.f32 %v796, %v806
  %v809 = vmul.f32 %v807, %v30
  %v810 = vmul.f32 %v808, %v31
  %v811 = vsel %vm665, %v809, 0.0
  %v812 = vsel %vm665, %v810, 0.0
  %v813 = vadd.f32 %v811, %v812
  %814 = vadd.xlane.f32.xlu0 %v813
  %v815 = vpop.xlane.xlu0 %814
  %v816 = vrot.slane %v815, 4
  %v817 = vadd.f32 %v815, %v816
  %v818 = vrot.slane %v817, 2
  %v819 = vadd.f32 %v817, %v818
  %v820 = vrot.slane %v819, 1
  %v821 = vadd.f32 %v819, %v820
  %s822 = vtos %v821
  %s823 = sadd.f32 %s740, %s822
  %v824 = vmul.f32 %v787, %v30
  %v825 = vmul.f32 %v788, %v30
  %v826 = vmul.f32 %v789, %v31
  %v827 = vmul.f32 %v790, %v31
  %v828 = vadd.f32 %v824, %v826
  %v829 = vrot.slane %v828, 4
  %v830 = vadd.f32 %v828, %v829
  %v831 = vrot.slane %v830, 2
  %v832 = vadd.f32 %v830, %v831
  %v833 = vrot.slane %v832, 1
  %v834 = vadd.f32 %v832, %v833
  %v835 = vadd.f32 %v825, %v827
  %v836 = vrot.slane %v835, 4
  %v837 = vadd.f32 %v835, %v836
  %v838 = vrot.slane %v837, 2
  %v839 = vadd.f32 %v837, %v838
  %v840 = vrot.slane %v839, 1
  %v841 = vadd.f32 %v839, %v840
  %v842 = vadd.f32 %v759, %v834
  %v843 = vadd.f32 %v760, %v841
  %v844 = vmax.f32 %v357, %v359
  %845 = vmax.xlane.f32.xlu0 %v844
  %v846 = vpop.xlane.xlu0 %845
  %v847 = vmax.f32 %v363, %v365
  %848 = vmax.xlane.f32.xlu0 %v847
  %v849 = vpop.xlane.xlu0 %848
  %v850 = vsub.f32 %v357, %v846
  %v851 = vsub.f32 %v359, %v846
  %v852 = vsub.f32 %v363, %v849
  %v853 = vsub.f32 %v365, %v849
  %v854 = vmul.f32 %v850, 1.442695
  %v855 = vpow.pop %v854
  %v856 = vmul.f32 %v851, 1.442695
  %v857 = vpow.pop %v856
  %v858 = vmul.f32 %v852, 1.442695
  %v859 = vpow.pop %v858
  %v860 = vmul.f32 %v853, 1.442695
  %v861 = vpow.pop %v860
  %v862 = vadd.f32 %v855, %v857
  %863 = vadd.xlane.f32.xlu0 %v862
  %v864 = vpop.xlane.xlu0 %863
  %v865 = vadd.f32 %v859, %v861
  %866 = vadd.xlane.f32.xlu0 %v865
  %v867 = vpop.xlane.xlu0 %866
  %v868 = vrcp.pop %v864
  %v869 = vrcp.pop %v867
  %v870 = vmul.f32 %v855, %v868
  %v871 = vmul.f32 %v857, %v868
  %v872 = vmul.f32 %v859, %v869
  %v873 = vmul.f32 %v861, %v869
  %v874 = vlog2.pop %v864
  %v875 = vmul.f32 %v874, 0.6931472
  %v876 = vlog2.pop %v867
  %v877 = vmul.f32 %v876, 0.6931472
  %v878 = vadd.f32 %v846, %v875
  %v879 = vadd.f32 %v849, %v877
  %v880 = vmul.f32 %v870, %v357
  %v881 = vmul.f32 %v871, %v359
  %v882 = vmul.f32 %v872, %v363
  %v883 = vmul.f32 %v873, %v365
  %v884 = vadd.f32 %v880, %v881
  %885 = vadd.xlane.f32.xlu0 %v884
  %v886 = vpop.xlane.xlu0 %885
  %v887 = vadd.f32 %v882, %v883
  %888 = vadd.xlane.f32.xlu0 %v887
  %v889 = vpop.xlane.xlu0 %888
  %v890 = vsub.f32 %v878, %v886
  %v891 = vsub.f32 %v879, %v889
  %v892 = vmul.f32 %v890, %v30
  %v893 = vmul.f32 %v891, %v31
  %v894 = vsel %vm665, %v892, 0.0
  %v895 = vsel %vm665, %v893, 0.0
  %v896 = vadd.f32 %v894, %v895
  %897 = vadd.xlane.f32.xlu0 %v896
  %v898 = vpop.xlane.xlu0 %897
  %v899 = vrot.slane %v898, 4
  %v900 = vadd.f32 %v898, %v899
  %v901 = vrot.slane %v900, 2
  %v902 = vadd.f32 %v900, %v901
  %v903 = vrot.slane %v902, 1
  %v904 = vadd.f32 %v902, %v903
  %s905 = vtos %v904
  %s906 = sadd.f32 %s823, %s905
  %v907 = vmul.f32 %v870, %v30
  %v908 = vmul.f32 %v871, %v30
  %v909 = vmul.f32 %v872, %v31
  %v910 = vmul.f32 %v873, %v31
  %v911 = vadd.f32 %v907, %v909
  %v912 = vrot.slane %v911, 4
  %v913 = vadd.f32 %v911, %v912
  %v914 = vrot.slane %v913, 2
  %v915 = vadd.f32 %v913, %v914
  %v916 = vrot.slane %v915, 1
  %v917 = vadd.f32 %v915, %v916
  %v918 = vadd.f32 %v908, %v910
  %v919 = vrot.slane %v918, 4
  %v920 = vadd.f32 %v918, %v919
  %v921 = vrot.slane %v920, 2
  %v922 = vadd.f32 %v920, %v921
  %v923 = vrot.slane %v922, 1
  %v924 = vadd.f32 %v922, %v923
  %v925 = vadd.f32 %v842, %v917
  %v926 = vadd.f32 %v843, %v924
  %v927 = vmax.f32 %v434, %v436
  %928 = vmax.xlane.f32.xlu0 %v927
  %v929 = vpop.xlane.xlu0 %928
  %v930 = vmax.f32 %v440, %v442
  %931 = vmax.xlane.f32.xlu0 %v930
  %v932 = vpop.xlane.xlu0 %931
  %v933 = vsub.f32 %v434, %v929
  %v934 = vsub.f32 %v436, %v929
  %v935 = vsub.f32 %v440, %v932
  %v936 = vsub.f32 %v442, %v932
  %v937 = vmul.f32 %v933, 1.442695
  %v938 = vpow.pop %v937
  %v939 = vmul.f32 %v934, 1.442695
  %v940 = vpow.pop %v939
  %v941 = vmul.f32 %v935, 1.442695
  %v942 = vpow.pop %v941
  %v943 = vmul.f32 %v936, 1.442695
  %v944 = vpow.pop %v943
  %v945 = vadd.f32 %v938, %v940
  %946 = vadd.xlane.f32.xlu0 %v945
  %v947 = vpop.xlane.xlu0 %946
  %v948 = vadd.f32 %v942, %v944
  %949 = vadd.xlane.f32.xlu0 %v948
  %v950 = vpop.xlane.xlu0 %949
  %v951 = vrcp.pop %v947
  %v952 = vrcp.pop %v950
  %v953 = vmul.f32 %v938, %v951
  %v954 = vmul.f32 %v940, %v951
  %v955 = vmul.f32 %v942, %v952
  %v956 = vmul.f32 %v944, %v952
  %v957 = vlog2.pop %v947
  %v958 = vmul.f32 %v957, 0.6931472
  %v959 = vlog2.pop %v950
  %v960 = vmul.f32 %v959, 0.6931472
  %v961 = vadd.f32 %v929, %v958
  %v962 = vadd.f32 %v932, %v960
  %v963 = vmul.f32 %v953, %v434
  %v964 = vmul.f32 %v954, %v436
  %v965 = vmul.f32 %v955, %v440
  %v966 = vmul.f32 %v956, %v442
  %v967 = vadd.f32 %v963, %v964
  %968 = vadd.xlane.f32.xlu0 %v967
  %v969 = vpop.xlane.xlu0 %968
  %v970 = vadd.f32 %v965, %v966
  %971 = vadd.xlane.f32.xlu0 %v970
  %v972 = vpop.xlane.xlu0 %971
  %v973 = vsub.f32 %v961, %v969
  %v974 = vsub.f32 %v962, %v972
  %v975 = vmul.f32 %v973, %v30
  %v976 = vmul.f32 %v974, %v31
  %v977 = vsel %vm665, %v975, 0.0
  %v978 = vsel %vm665, %v976, 0.0
  %v979 = vadd.f32 %v977, %v978
  %980 = vadd.xlane.f32.xlu0 %v979
  %v981 = vpop.xlane.xlu0 %980
  %v982 = vrot.slane %v981, 4
  %v983 = vadd.f32 %v981, %v982
  %v984 = vrot.slane %v983, 2
  %v985 = vadd.f32 %v983, %v984
  %v986 = vrot.slane %v985, 1
  %v987 = vadd.f32 %v985, %v986
  %s988 = vtos %v987
  %s989 = sadd.f32 %s906, %s988
  %v990 = vmul.f32 %v953, %v30
  %v991 = vmul.f32 %v954, %v30
  %v992 = vmul.f32 %v955, %v31
  %v993 = vmul.f32 %v956, %v31
  %v994 = vadd.f32 %v990, %v992
  %v995 = vrot.slane %v994, 4
  %v996 = vadd.f32 %v994, %v995
  %v997 = vrot.slane %v996, 2
  %v998 = vadd.f32 %v996, %v997
  %v999 = vrot.slane %v998, 1
  %v1000 = vadd.f32 %v998, %v999
  %v1001 = vadd.f32 %v991, %v993
  %v1002 = vrot.slane %v1001, 4
  %v1003 = vadd.f32 %v1001, %v1002
  %v1004 = vrot.slane %v1003, 2
  %v1005 = vadd.f32 %v1003, %v1004
  %v1006 = vrot.slane %v1005, 1
  %v1007 = vadd.f32 %v1005, %v1006
  %v1008 = vadd.f32 %v925, %v1000
  %v1009 = vadd.f32 %v926, %v1007
  %vm1010 = vcmp.eq.s32.totalorder %v21, 0
  %v1011 = vsel %vm1010, %v1008, 0.0
  %v1012 = vsel %vm1010, %v1009, 0.0
  %vm1013 = vcmp.eq.s32.totalorder %v21, 1
  %v1014 = vstv %s989
  %v1015 = vsel %vm1013, %v1014, %v1011
  %v1016 = vsel %vm1013, %v1014, %v1012
  %vm1017 = vcmp.eq.s32.totalorder %v21, 2
  %v1018 = vstv %s677
  %v1019 = vsel %vm1017, %v1018, %v1015
  %v1020 = vsel %vm1017, %v1018, %v1016
  %1021 = vst [vmem:[%s5] sm:$0xff] %v1019
  %1022 = vst [vmem:[%s5 + $0x8] sm:$0xff] %v1020
  // Predicated region
  $region14: #{lfq_wrapper_forward.1} parent=0 // pred_check
    _
  $region15: #{lfq_wrapper_forward.1} parent=0 // pred_check_branch
    %1024 = sbr.rel (0) target = $region17
  $region16: #{lfq_wrapper_forward.1} parent=0 // pred_region
    _
  $region17: #{lfq_wrapper_forward.1} parent=0 // pred_fallthru
    _
  // Predicated region
  $region18: #{lfq_wrapper_forward.1} parent=0 // pred_check
    _
  $region19: #{lfq_wrapper_forward.1} parent=0 // pred_check_branch
    %1026 = sbr.rel (0) target = $region21
  $region20: #{lfq_wrapper_forward.1} parent=0 // pred_region
    _
  $region21: #{lfq_wrapper_forward.1} parent=0 // pred_fallthru
    _
  // Predicated region
  $region22: #{lfq_wrapper_forward.1} parent=0 // pred_check
    _
  $region23: #{lfq_wrapper_forward.1} parent=0 // pred_check_branch
    %1028 = sbr.rel (0) target = $region25
  $region24: #{lfq_wrapper_forward.1} parent=0 // pred_region
    _
  $region25: #{lfq_wrapper_forward.1} parent=0 // pred_fallthru
    _
  // Predicated region
  $region26: #{lfq_wrapper_forward.1} parent=0 // pred_check
    _
  $region27: #{lfq_wrapper_forward.1} parent=0 // pred_check_branch
    %1030 = sbr.rel (0) target = $region29
  $region28: #{lfq_wrapper_forward.1} parent=0 // pred_region
    _
  $region29: #{lfq_wrapper_forward.1} parent=0 // pred_fallthru
    _
  // Predicated region
  $region30: #{lfq_wrapper_forward.1} parent=0 // pred_check
    _
  $region31: #{lfq_wrapper_forward.1} parent=0 // pred_check_branch
    %1032 = sbr.rel (0) target = $region33
  $region32: #{lfq_wrapper_forward.1} parent=0 // pred_region
    _
  $region33: #{lfq_wrapper_forward.1} parent=0 // pred_fallthru
    _
  // Predicated region
  $region34: #{lfq_wrapper_forward.1} parent=0 // pred_check
    _
  $region35: #{lfq_wrapper_forward.1} parent=0 // pred_check_branch
    %1034 = sbr.rel (0) target = $region37
  $region36: #{lfq_wrapper_forward.1} parent=0 // pred_region
    _
  $region37: #{lfq_wrapper_forward.1} parent=0 // pred_fallthru
    _

</llo_original>
